<compile_context>
chip_gen: v5e
topology: v5e:2x2
jax: 0.10.0
libtpu: 0.0.40
codegen_flags: <defaults>
</compile_context>

<pallas_src>
import jax
import jax.numpy as jnp
import numpy as np
from jax import lax
from jax.experimental import pallas as pl
from jax.experimental.pallas import tpu as pltpu

# ---- configuration (NOIEmbedding(dim=32, max_seq_len=100, l2norm_embed=False))
DIM = 32
MAX_SEQ_LEN = 100
L2NORM_EMBED = False
B, T = 2, 8                      # batch, sequence length of the index tensor


def noi_embedding(x_ids, emb_table, *, l2norm_embed=L2NORM_EMBED):
    """x_ids: (B, T) int indices; emb_table: (V, D) f32. Returns (B, T, D) f32."""
    b, t = x_ids.shape
    v, d = emb_table.shape
    n = b * t
    scale = 1.0 if l2norm_embed else d ** (-0.5)

    # nn.Embedding requires 0 <= idx < max_seq_len.  Clamp so a bad index can
    # never turn into an unchecked OOB VMEM read inside the kernel.
    ids = jnp.clip(x_ids.reshape(n).astype(jnp.int32), 0, v - 1)

    def kernel(ids_ref, table_ref, out_ref):
        # ids_ref: SMEM (N,) int32  |  table_ref: VMEM (V, D)  |  out_ref: VMEM (N, D)
        # Scalar-indexed row gather: one dynamic-sublane load per token.
        sub = lax.broadcasted_iota(jnp.int32, (n, d), 0)      # output-row index map
        emb = jnp.zeros((n, d), jnp.float32)
        for i in range(n):                                    # static, fully unrolled
            row = table_ref[pl.ds(ids_ref[i], 1), :]          # (1, D) gathered row
            emb = jnp.where(sub == i, row, emb)               # place row i (VPU select)
        if l2norm_embed:
            # scale == 1.0 on this path; matches F.normalize(x, dim=-1, eps=1e-12)
            norm = jnp.sqrt(jnp.sum(emb * emb, axis=-1, keepdims=True))
            emb = emb / jnp.maximum(norm, 1e-12)
        else:
            emb = emb * scale                                 # single fused VPU multiply
        out_ref[...] = emb                                    # single (N, D) store

    out = pl.pallas_call(
        kernel,
        out_shape=jax.ShapeDtypeStruct((n, d), jnp.float32),
        in_specs=[
            pl.BlockSpec(memory_space=pltpu.MemorySpace.SMEM),   # indices -> SMEM scalars
            pl.BlockSpec(memory_space=pltpu.MemorySpace.VMEM),   # full embedding table
        ],
        out_specs=pl.BlockSpec(memory_space=pltpu.MemorySpace.VMEM),
    )(ids, emb_table)

    return out.reshape(b, t, d)


def noi_embedding_ref(x_ids, emb_table, *, l2norm_embed=L2NORM_EMBED):
    d = emb_table.shape[1]
    scale = 1.0 if l2norm_embed else d ** (-0.5)
    out = emb_table[x_ids] * scale
    if l2norm_embed:
        out = out / jnp.maximum(
            jnp.linalg.norm(out, axis=-1, keepdims=True), 1e-12)
    return out


if __name__ == "__main__":
    key = jax.random.PRNGKey(0)
    k_ids, k_emb = jax.random.split(key, 2)

    # integer position indices and the embedding table (nn.Embedding ~ N(0, 1))
    x = jax.random.randint(k_ids, (B, T), 0, MAX_SEQ_LEN, dtype=jnp.int32)
    emb_table = jax.random.normal(k_emb, (MAX_SEQ_LEN, DIM), jnp.float32)

    out = noi_embedding(x, emb_table)
    out = jax.block_until_ready(out)

    ref = jax.block_until_ready(noi_embedding_ref(x, emb_table))
    np.testing.assert_allclose(np.asarray(out), np.asarray(ref),
                               rtol=1e-6, atol=1e-6)
    assert out.shape == (B, T, DIM)
    print("KERNEL_OK")
</pallas_src>

<mosaic_0001>
module attributes {stable_mosaic.version = 11 : i64} {
  func.func @kernel(%arg0: memref<16xi32, #tpu.memory_space<smem>>, %arg1: memref<100x32xf32, #tpu.memory_space<vmem>>, %arg2: memref<16x32xf32, #tpu.memory_space<vmem>>) attributes {dimension_semantics = [], scalar_prefetch = 0 : i64, scratch_operands = 0 : i64, tpu.core_type = #tpu.core_type<tc>} {
    %0 = tpu.iota {dimensions = array<i32: 0>} : vector<16x32xi32>
    %cst = arith.constant 0.000000e+00 : f32
    %1 = vector.broadcast %cst : f32 to vector<16x32xf32>
    %c0 = arith.constant 0 : index
    %2 = memref.load %arg0[%c0] : memref<16xi32, #tpu.memory_space<smem>>
    %3 = arith.index_cast %2 : i32 to index
    %c0_0 = arith.constant 0 : index
    %4 = vector.load %arg1[%3, %c0_0] : memref<100x32xf32, #tpu.memory_space<vmem>>, vector<1x32xf32>
    %c0_i32 = arith.constant 0 : i32
    %5 = vector.broadcast %c0_i32 : i32 to vector<16x32xi32>
    %6 = arith.cmpi eq, %0, %5 : vector<16x32xi32>
    %7 = vector.shape_cast %4 : vector<1x32xf32> to vector<1x32xf32>
    %8 = vector.broadcast %7 : vector<1x32xf32> to vector<16x32xf32>
    %9 = arith.select %6, %8, %1 : vector<16x32xi1>, vector<16x32xf32>
    %c1 = arith.constant 1 : index
    %10 = memref.load %arg0[%c1] : memref<16xi32, #tpu.memory_space<smem>>
    %11 = arith.index_cast %10 : i32 to index
    %c0_1 = arith.constant 0 : index
    %12 = vector.load %arg1[%11, %c0_1] : memref<100x32xf32, #tpu.memory_space<vmem>>, vector<1x32xf32>
    %c1_i32 = arith.constant 1 : i32
    %13 = vector.broadcast %c1_i32 : i32 to vector<16x32xi32>
    %14 = arith.cmpi eq, %0, %13 : vector<16x32xi32>
    %15 = vector.shape_cast %12 : vector<1x32xf32> to vector<1x32xf32>
    %16 = vector.broadcast %15 : vector<1x32xf32> to vector<16x32xf32>
    %17 = arith.select %14, %16, %9 : vector<16x32xi1>, vector<16x32xf32>
    %c2 = arith.constant 2 : index
    %18 = memref.load %arg0[%c2] : memref<16xi32, #tpu.memory_space<smem>>
    %19 = arith.index_cast %18 : i32 to index
    %c0_2 = arith.constant 0 : index
    %20 = vector.load %arg1[%19, %c0_2] : memref<100x32xf32, #tpu.memory_space<vmem>>, vector<1x32xf32>
    %c2_i32 = arith.constant 2 : i32
    %21 = vector.broadcast %c2_i32 : i32 to vector<16x32xi32>
    %22 = arith.cmpi eq, %0, %21 : vector<16x32xi32>
    %23 = vector.shape_cast %20 : vector<1x32xf32> to vector<1x32xf32>
    %24 = vector.broadcast %23 : vector<1x32xf32> to vector<16x32xf32>
    %25 = arith.select %22, %24, %17 : vector<16x32xi1>, vector<16x32xf32>
    %c3 = arith.constant 3 : index
    %26 = memref.load %arg0[%c3] : memref<16xi32, #tpu.memory_space<smem>>
    %27 = arith.index_cast %26 : i32 to index
    %c0_3 = arith.constant 0 : index
    %28 = vector.load %arg1[%27, %c0_3] : memref<100x32xf32, #tpu.memory_space<vmem>>, vector<1x32xf32>
    %c3_i32 = arith.constant 3 : i32
    %29 = vector.broadcast %c3_i32 : i32 to vector<16x32xi32>
    %30 = arith.cmpi eq, %0, %29 : vector<16x32xi32>
    %31 = vector.shape_cast %28 : vector<1x32xf32> to vector<1x32xf32>
    %32 = vector.broadcast %31 : vector<1x32xf32> to vector<16x32xf32>
    %33 = arith.select %30, %32, %25 : vector<16x32xi1>, vector<16x32xf32>
    %c4 = arith.constant 4 : index
    %34 = memref.load %arg0[%c4] : memref<16xi32, #tpu.memory_space<smem>>
    %35 = arith.index_cast %34 : i32 to index
    %c0_4 = arith.constant 0 : index
    %36 = vector.load %arg1[%35, %c0_4] : memref<100x32xf32, #tpu.memory_space<vmem>>, vector<1x32xf32>
    %c4_i32 = arith.constant 4 : i32
    %37 = vector.broadcast %c4_i32 : i32 to vector<16x32xi32>
    %38 = arith.cmpi eq, %0, %37 : vector<16x32xi32>
    %39 = vector.shape_cast %36 : vector<1x32xf32> to vector<1x32xf32>
    %40 = vector.broadcast %39 : vector<1x32xf32> to vector<16x32xf32>
    %41 = arith.select %38, %40, %33 : vector<16x32xi1>, vector<16x32xf32>
    %c5 = arith.constant 5 : index
    %42 = memref.load %arg0[%c5] : memref<16xi32, #tpu.memory_space<smem>>
    %43 = arith.index_cast %42 : i32 to index
    %c0_5 = arith.constant 0 : index
    %44 = vector.load %arg1[%43, %c0_5] : memref<100x32xf32, #tpu.memory_space<vmem>>, vector<1x32xf32>
    %c5_i32 = arith.constant 5 : i32
    %45 = vector.broadcast %c5_i32 : i32 to vector<16x32xi32>
    %46 = arith.cmpi eq, %0, %45 : vector<16x32xi32>
    %47 = vector.shape_cast %44 : vector<1x32xf32> to vector<1x32xf32>
    %48 = vector.broadcast %47 : vector<1x32xf32> to vector<16x32xf32>
    %49 = arith.select %46, %48, %41 : vector<16x32xi1>, vector<16x32xf32>
    %c6 = arith.constant 6 : index
    %50 = memref.load %arg0[%c6] : memref<16xi32, #tpu.memory_space<smem>>
    %51 = arith.index_cast %50 : i32 to index
    %c0_6 = arith.constant 0 : index
    %52 = vector.load %arg1[%51, %c0_6] : memref<100x32xf32, #tpu.memory_space<vmem>>, vector<1x32xf32>
    %c6_i32 = arith.constant 6 : i32
    %53 = vector.broadcast %c6_i32 : i32 to vector<16x32xi32>
    %54 = arith.cmpi eq, %0, %53 : vector<16x32xi32>
    %55 = vector.shape_cast %52 : vector<1x32xf32> to vector<1x32xf32>
    %56 = vector.broadcast %55 : vector<1x32xf32> to vector<16x32xf32>
    %57 = arith.select %54, %56, %49 : vector<16x32xi1>, vector<16x32xf32>
    %c7 = arith.constant 7 : index
    %58 = memref.load %arg0[%c7] : memref<16xi32, #tpu.memory_space<smem>>
    %59 = arith.index_cast %58 : i32 to index
    %c0_7 = arith.constant 0 : index
    %60 = vector.load %arg1[%59, %c0_7] : memref<100x32xf32, #tpu.memory_space<vmem>>, vector<1x32xf32>
    %c7_i32 = arith.constant 7 : i32
    %61 = vector.broadcast %c7_i32 : i32 to vector<16x32xi32>
    %62 = arith.cmpi eq, %0, %61 : vector<16x32xi32>
    %63 = vector.shape_cast %60 : vector<1x32xf32> to vector<1x32xf32>
    %64 = vector.broadcast %63 : vector<1x32xf32> to vector<16x32xf32>
    %65 = arith.select %62, %64, %57 : vector<16x32xi1>, vector<16x32xf32>
    %c8 = arith.constant 8 : index
    %66 = memref.load %arg0[%c8] : memref<16xi32, #tpu.memory_space<smem>>
    %67 = arith.index_cast %66 : i32 to index
    %c0_8 = arith.constant 0 : index
    %68 = vector.load %arg1[%67, %c0_8] : memref<100x32xf32, #tpu.memory_space<vmem>>, vector<1x32xf32>
    %c8_i32 = arith.constant 8 : i32
    %69 = vector.broadcast %c8_i32 : i32 to vector<16x32xi32>
    %70 = arith.cmpi eq, %0, %69 : vector<16x32xi32>
    %71 = vector.shape_cast %68 : vector<1x32xf32> to vector<1x32xf32>
    %72 = vector.broadcast %71 : vector<1x32xf32> to vector<16x32xf32>
    %73 = arith.select %70, %72, %65 : vector<16x32xi1>, vector<16x32xf32>
    %c9 = arith.constant 9 : index
    %74 = memref.load %arg0[%c9] : memref<16xi32, #tpu.memory_space<smem>>
    %75 = arith.index_cast %74 : i32 to index
    %c0_9 = arith.constant 0 : index
    %76 = vector.load %arg1[%75, %c0_9] : memref<100x32xf32, #tpu.memory_space<vmem>>, vector<1x32xf32>
    %c9_i32 = arith.constant 9 : i32
    %77 = vector.broadcast %c9_i32 : i32 to vector<16x32xi32>
    %78 = arith.cmpi eq, %0, %77 : vector<16x32xi32>
    %79 = vector.shape_cast %76 : vector<1x32xf32> to vector<1x32xf32>
    %80 = vector.broadcast %79 : vector<1x32xf32> to vector<16x32xf32>
    %81 = arith.select %78, %80, %73 : vector<16x32xi1>, vector<16x32xf32>
    %c10 = arith.constant 10 : index
    %82 = memref.load %arg0[%c10] : memref<16xi32, #tpu.memory_space<smem>>
    %83 = arith.index_cast %82 : i32 to index
    %c0_10 = arith.constant 0 : index
    %84 = vector.load %arg1[%83, %c0_10] : memref<100x32xf32, #tpu.memory_space<vmem>>, vector<1x32xf32>
    %c10_i32 = arith.constant 10 : i32
    %85 = vector.broadcast %c10_i32 : i32 to vector<16x32xi32>
    %86 = arith.cmpi eq, %0, %85 : vector<16x32xi32>
    %87 = vector.shape_cast %84 : vector<1x32xf32> to vector<1x32xf32>
    %88 = vector.broadcast %87 : vector<1x32xf32> to vector<16x32xf32>
    %89 = arith.select %86, %88, %81 : vector<16x32xi1>, vector<16x32xf32>
    %c11 = arith.constant 11 : index
    %90 = memref.load %arg0[%c11] : memref<16xi32, #tpu.memory_space<smem>>
    %91 = arith.index_cast %90 : i32 to index
    %c0_11 = arith.constant 0 : index
    %92 = vector.load %arg1[%91, %c0_11] : memref<100x32xf32, #tpu.memory_space<vmem>>, vector<1x32xf32>
    %c11_i32 = arith.constant 11 : i32
    %93 = vector.broadcast %c11_i32 : i32 to vector<16x32xi32>
    %94 = arith.cmpi eq, %0, %93 : vector<16x32xi32>
    %95 = vector.shape_cast %92 : vector<1x32xf32> to vector<1x32xf32>
    %96 = vector.broadcast %95 : vector<1x32xf32> to vector<16x32xf32>
    %97 = arith.select %94, %96, %89 : vector<16x32xi1>, vector<16x32xf32>
    %c12 = arith.constant 12 : index
    %98 = memref.load %arg0[%c12] : memref<16xi32, #tpu.memory_space<smem>>
    %99 = arith.index_cast %98 : i32 to index
    %c0_12 = arith.constant 0 : index
    %100 = vector.load %arg1[%99, %c0_12] : memref<100x32xf32, #tpu.memory_space<vmem>>, vector<1x32xf32>
    %c12_i32 = arith.constant 12 : i32
    %101 = vector.broadcast %c12_i32 : i32 to vector<16x32xi32>
    %102 = arith.cmpi eq, %0, %101 : vector<16x32xi32>
    %103 = vector.shape_cast %100 : vector<1x32xf32> to vector<1x32xf32>
    %104 = vector.broadcast %103 : vector<1x32xf32> to vector<16x32xf32>
    %105 = arith.select %102, %104, %97 : vector<16x32xi1>, vector<16x32xf32>
    %c13 = arith.constant 13 : index
    %106 = memref.load %arg0[%c13] : memref<16xi32, #tpu.memory_space<smem>>
    %107 = arith.index_cast %106 : i32 to index
    %c0_13 = arith.constant 0 : index
    %108 = vector.load %arg1[%107, %c0_13] : memref<100x32xf32, #tpu.memory_space<vmem>>, vector<1x32xf32>
    %c13_i32 = arith.constant 13 : i32
    %109 = vector.broadcast %c13_i32 : i32 to vector<16x32xi32>
    %110 = arith.cmpi eq, %0, %109 : vector<16x32xi32>
    %111 = vector.shape_cast %108 : vector<1x32xf32> to vector<1x32xf32>
    %112 = vector.broadcast %111 : vector<1x32xf32> to vector<16x32xf32>
    %113 = arith.select %110, %112, %105 : vector<16x32xi1>, vector<16x32xf32>
    %c14 = arith.constant 14 : index
    %114 = memref.load %arg0[%c14] : memref<16xi32, #tpu.memory_space<smem>>
    %115 = arith.index_cast %114 : i32 to index
    %c0_14 = arith.constant 0 : index
    %116 = vector.load %arg1[%115, %c0_14] : memref<100x32xf32, #tpu.memory_space<vmem>>, vector<1x32xf32>
    %c14_i32 = arith.constant 14 : i32
    %117 = vector.broadcast %c14_i32 : i32 to vector<16x32xi32>
    %118 = arith.cmpi eq, %0, %117 : vector<16x32xi32>
    %119 = vector.shape_cast %116 : vector<1x32xf32> to vector<1x32xf32>
    %120 = vector.broadcast %119 : vector<1x32xf32> to vector<16x32xf32>
    %121 = arith.select %118, %120, %113 : vector<16x32xi1>, vector<16x32xf32>
    %c15 = arith.constant 15 : index
    %122 = memref.load %arg0[%c15] : memref<16xi32, #tpu.memory_space<smem>>
    %123 = arith.index_cast %122 : i32 to index
    %c0_15 = arith.constant 0 : index
    %124 = vector.load %arg1[%123, %c0_15] : memref<100x32xf32, #tpu.memory_space<vmem>>, vector<1x32xf32>
    %c15_i32 = arith.constant 15 : i32
    %125 = vector.broadcast %c15_i32 : i32 to vector<16x32xi32>
    %126 = arith.cmpi eq, %0, %125 : vector<16x32xi32>
    %127 = vector.shape_cast %124 : vector<1x32xf32> to vector<1x32xf32>
    %128 = vector.broadcast %127 : vector<1x32xf32> to vector<16x32xf32>
    %129 = arith.select %126, %128, %121 : vector<16x32xi1>, vector<16x32xf32>
    %cst_16 = arith.constant 0.176776692 : f32
    %130 = vector.broadcast %cst_16 : f32 to vector<16x32xf32>
    %131 = arith.mulf %129, %130 : vector<16x32xf32>
    %c0_17 = arith.constant 0 : index
    %c0_18 = arith.constant 0 : index
    %132 = vector.load %arg2[%c0_17, %c0_18] : memref<16x32xf32, #tpu.memory_space<vmem>>, vector<16x32xf32>
    tpu.vector_store %arg2[%c0_17, %c0_18], %131 {strides = array<i32>} : memref<16x32xf32, #tpu.memory_space<vmem>>, vector<16x32xf32>,
    return
  }
}

</mosaic_0001>

<llo_original>
// kernel: tpu_custom_call.1
$region0: #{tpu_custom_call.1}
  #allocation0 [shape = 'u32[]', space=smem, size = 0x4, offset = 0x4, fixed_abs, tag = 'smem constant byte address 0x4 - core index']
  #allocation1 [shape = 'u32[72,128]{1,0:T(1,128)}', space=vmem, size = 0x9000, scoped, tag = 'internal scratch']
  %s0 = inlined_call_operand.vmem [shape: s32[16], index: 0, kind: input, shape index: {}]
  %s1 = inlined_call_operand.vmem [shape: f32[100,32], index: 1, kind: input, shape index: {}]
  %s2 = inlined_call_operand.hbm [shape: f32[16,32], index: 2, kind: output, shape index: {}]
  %s3 = sld [smem:[#allocation0]]
  $region22: #{tpu_custom_call.1} parent=0
    _
  %s5 = ssub.s32 1, %s3
  %s6 = scalar_select 0, %s5, %s3
  $region1: #{tpu_custom_call.1} parent=0
    #allocation2 [shape = 'u8[512]{0}', space=smem, size = 0x200, scoped, tag = 'input window, operand 0, single buffered']
    #allocation3 [shape = 's32[1]{0}', space=sflag, size = 0x4, scoped, tag = 'scoped memory for tpu_custom_call.1']
    #allocation4 [shape = 's32[1]{0}', space=sflag, size = 0x4, scoped, tag = 'scoped memory for tpu_custom_call.1']
    #allocation5 [shape = 'u8[8192]{0}', space=vmem, size = 0x2000, scoped, tag = 'output window, operand 0, single buffered']
    %7 = vsyncpa [#allocation4], 0
    %8 = vsyncpa [#allocation3], 0
    // Predicated region
    $region2: #{tpu_custom_call.1} parent=1 // pred_check
      _
    $region3: #{tpu_custom_call.1} parent=1 // pred_check_branch
      %10 = sbr.rel (0) target = $region5
    $region4: #{tpu_custom_call.1} parent=1 // pred_region
      %12 = vsyncadd [#allocation4], 0
      %s14 = sshll.u32 %s0, 4
      %s15 = int_to_ptr.vmem [resolvable:$true] %s14
      %17 = dma.vmem_to_smem %s15, 16, [#allocation2], [#allocation4]
    $region5: #{tpu_custom_call.1} parent=1 // pred_fallthru
      _
    // Predicated region
    $region6: #{tpu_custom_call.1} parent=1 // pred_check
      _
    $region7: #{tpu_custom_call.1} parent=1 // pred_check_branch
      %19 = sbr.rel (0) target = $region9
    $region8: #{tpu_custom_call.1} parent=1 // pred_region
      _
    $region9: #{tpu_custom_call.1} parent=1 // pred_fallthru
      _
    // Predicated region
    $region10: #{tpu_custom_call.1} parent=1 // pred_check
      _
    $region11: #{tpu_custom_call.1} parent=1 // pred_check_branch
      %21 = sbr.rel (0) target = $region13
    $region12: #{tpu_custom_call.1} parent=1 // pred_region
      %23 = dma.done [#allocation4], 16
    $region13: #{tpu_custom_call.1} parent=1 // pred_fallthru
      _
    %24 = sfence
    %v25 = vlaneseq
    %v26 = vshrl.u32 %v25, 7
    %v27 = vadd.s32 %v26, 8
    %s28 = sld [smem:[#allocation2]]
    %s29 = scalar_lea.vmem %s1, %s28
    %v30 = vld [vmem:[%s29] sm:$0x1]
    %vm31 = vcmp.eq.s32.totalorder %v26, 0
    %vm32 = vcmp.eq.s32.totalorder %v27, 0
    %v33 = vperm.slane %v30, 0
    %v34 = vsel %vm31, %v33, 0.0
    %v35 = vsel %vm32, %v33, 0.0
    %s36 = sld [smem:[#allocation2 + $0x1]]
    %s37 = scalar_lea.vmem %s1, %s36
    %v38 = vld [vmem:[%s37] sm:$0x1]
    %vm39 = vcmp.eq.s32.totalorder %v26, 1
    %vm40 = vcmp.eq.s32.totalorder %v27, 1
    %v41 = vperm.slane %v38, 0
    %v42 = vsel %vm39, %v41, %v34
    %v43 = vsel %vm40, %v41, %v35
    %s44 = sld [smem:[#allocation2 + $0x2]]
    %s45 = scalar_lea.vmem %s1, %s44
    %v46 = vld [vmem:[%s45] sm:$0x1]
    %vm47 = vcmp.eq.s32.totalorder %v26, 2
    %vm48 = vcmp.eq.s32.totalorder %v27, 2
    %v49 = vperm.slane %v46, 0
    %v50 = vsel %vm47, %v49, %v42
    %v51 = vsel %vm48, %v49, %v43
    %s52 = sld [smem:[#allocation2 + $0x3]]
    %s53 = scalar_lea.vmem %s1, %s52
    %v54 = vld [vmem:[%s53] sm:$0x1]
    %vm55 = vcmp.eq.s32.totalorder %v26, 3
    %vm56 = vcmp.eq.s32.totalorder %v27, 3
    %v57 = vperm.slane %v54, 0
    %v58 = vsel %vm55, %v57, %v50
    %v59 = vsel %vm56, %v57, %v51
    %s60 = sld [smem:[#allocation2 + $0x4]]
    %s61 = scalar_lea.vmem %s1, %s60
    %v62 = vld [vmem:[%s61] sm:$0x1]
    %vm63 = vcmp.eq.s32.totalorder %v26, 4
    %vm64 = vcmp.eq.s32.totalorder %v27, 4
    %v65 = vperm.slane %v62, 0
    %v66 = vsel %vm63, %v65, %v58
    %v67 = vsel %vm64, %v65, %v59
    %s68 = sld [smem:[#allocation2 + $0x5]]
    %s69 = scalar_lea.vmem %s1, %s68
    %v70 = vld [vmem:[%s69] sm:$0x1]
    %vm71 = vcmp.eq.s32.totalorder %v26, 5
    %vm72 = vcmp.eq.s32.totalorder %v27, 5
    %v73 = vperm.slane %v70, 0
    %v74 = vsel %vm71, %v73, %v66
    %v75 = vsel %vm72, %v73, %v67
    %s76 = sld [smem:[#allocation2 + $0x6]]
    %s77 = scalar_lea.vmem %s1, %s76
    %v78 = vld [vmem:[%s77] sm:$0x1]
    %vm79 = vcmp.eq.s32.totalorder %v26, 6
    %vm80 = vcmp.eq.s32.totalorder %v27, 6
    %v81 = vperm.slane %v78, 0
    %v82 = vsel %vm79, %v81, %v74
    %v83 = vsel %vm80, %v81, %v75
    %s84 = sld [smem:[#allocation2 + $0x7]]
    %s85 = scalar_lea.vmem %s1, %s84
    %v86 = vld [vmem:[%s85] sm:$0x1]
    %vm87 = vcmp.eq.s32.totalorder %v26, 7
    %vm88 = vcmp.eq.s32.totalorder %v27, 7
    %v89 = vperm.slane %v86, 0
    %v90 = vsel %vm87, %v89, %v82
    %v91 = vsel %vm88, %v89, %v83
    %s92 = sld [smem:[#allocation2 + $0x8]]
    %s93 = scalar_lea.vmem %s1, %s92
    %v94 = vld [vmem:[%s93] sm:$0x1]
    %vm95 = vcmp.eq.s32.totalorder %v26, 8
    %vm96 = vcmp.eq.s32.totalorder %v27, 8
    %v97 = vperm.slane %v94, 0
    %v98 = vsel %vm95, %v97, %v90
    %v99 = vsel %vm96, %v97, %v91
    %s100 = sld [smem:[#allocation2 + $0x9]]
    %s101 = scalar_lea.vmem %s1, %s100
    %v102 = vld [vmem:[%s101] sm:$0x1]
    %vm103 = vcmp.eq.s32.totalorder %v26, 9
    %vm104 = vcmp.eq.s32.totalorder %v27, 9
    %v105 = vperm.slane %v102, 0
    %v106 = vsel %vm103, %v105, %v98
    %v107 = vsel %vm104, %v105, %v99
    %s108 = sld [smem:[#allocation2 + $0xa]]
    %s109 = scalar_lea.vmem %s1, %s108
    %v110 = vld [vmem:[%s109] sm:$0x1]
    %vm111 = vcmp.eq.s32.totalorder %v26, 10
    %vm112 = vcmp.eq.s32.totalorder %v27, 10
    %v113 = vperm.slane %v110, 0
    %v114 = vsel %vm111, %v113, %v106
    %v115 = vsel %vm112, %v113, %v107
    %s116 = sld [smem:[#allocation2 + $0xb]]
    %s117 = scalar_lea.vmem %s1, %s116
    %v118 = vld [vmem:[%s117] sm:$0x1]
    %vm119 = vcmp.eq.s32.totalorder %v26, 11
    %vm120 = vcmp.eq.s32.totalorder %v27, 11
    %v121 = vperm.slane %v118, 0
    %v122 = vsel %vm119, %v121, %v114
    %v123 = vsel %vm120, %v121, %v115
    %s124 = sld [smem:[#allocation2 + $0xc]]
    %s125 = scalar_lea.vmem %s1, %s124
    %v126 = vld [vmem:[%s125] sm:$0x1]
    %vm127 = vcmp.eq.s32.totalorder %v26, 12
    %vm128 = vcmp.eq.s32.totalorder %v27, 12
    %v129 = vperm.slane %v126, 0
    %v130 = vsel %vm127, %v129, %v122
    %v131 = vsel %vm128, %v129, %v123
    %s132 = sld [smem:[#allocation2 + $0xd]]
    %s133 = scalar_lea.vmem %s1, %s132
    %v134 = vld [vmem:[%s133] sm:$0x1]
    %vm135 = vcmp.eq.s32.totalorder %v26, 13
    %vm136 = vcmp.eq.s32.totalorder %v27, 13
    %v137 = vperm.slane %v134, 0
    %v138 = vsel %vm135, %v137, %v130
    %v139 = vsel %vm136, %v137, %v131
    %s140 = sld [smem:[#allocation2 + $0xe]]
    %s141 = scalar_lea.vmem %s1, %s140
    %v142 = vld [vmem:[%s141] sm:$0x1]
    %vm143 = vcmp.eq.s32.totalorder %v26, 14
    %vm144 = vcmp.eq.s32.totalorder %v27, 14
    %v145 = vperm.slane %v142, 0
    %v146 = vsel %vm143, %v145, %v138
    %v147 = vsel %vm144, %v145, %v139
    %s148 = sld [smem:[#allocation2 + $0xf]]
    %s149 = scalar_lea.vmem %s1, %s148
    %v150 = vld [vmem:[%s149] sm:$0x1]
    %vm151 = vcmp.eq.s32.totalorder %v26, 15
    %vm152 = vcmp.eq.s32.totalorder %v27, 15
    %v153 = vperm.slane %v150, 0
    %v154 = vsel %vm151, %v153, %v146
    %v155 = vsel %vm152, %v153, %v147
    %v156 = vmul.f32 %v154, 0.17677669
    %v157 = vmul.f32 %v155, 0.17677669
    %vm158 = vcmask 261120
    %159 = vst.msk [vmem:[#allocation5] sm:$0xff] %vm158, %v156
    %160 = vst.msk [vmem:[#allocation5 + $0x8] sm:$0xff] %vm158, %v157
    // Predicated region
    $region14: #{tpu_custom_call.1} parent=1 // pred_check
      _
    $region15: #{tpu_custom_call.1} parent=1 // pred_check_branch
      %162 = sbr.rel (0) target = $region17
    $region16: #{tpu_custom_call.1} parent=1 // pred_region
      %164 = vsyncadd [#allocation3], 0
      %s165 = sshll.u32 [#allocation5], 4
      %s166 = int_to_ptr.vmem [resolvable:$true] %s165
      %s167 = sshll.u32 %s2, 4
      %s168 = int_to_ptr.hbm [resolvable:$true] %s167
      %173 = dma.vmem_to_hbm [thread:$0]  %s166, 256, %s168, [#allocation3], 128, 128, 8
    $region17: #{tpu_custom_call.1} parent=1 // pred_fallthru
      _
    // Predicated region
    $region18: #{tpu_custom_call.1} parent=1 // pred_check
      _
    $region19: #{tpu_custom_call.1} parent=1 // pred_check_branch
      %175 = sbr.rel (0) target = $region21
    $region20: #{tpu_custom_call.1} parent=1 // pred_region
      %177 = dma.done [#allocation3], 256
    $region21: #{tpu_custom_call.1} parent=1 // pred_fallthru
      _
    %178 = vsyncpa [#allocation3], 1
    %179 = vsyncpa [#allocation4], 1

</llo_original>
